<compile_context>
chip_gen: v6e
topology: v6e:2x2x1
jax: 0.10.0
libtpu: 0.0.40
codegen_flags: <defaults>
</compile_context>

<pallas_src>
import functools
import math

import jax
import jax.numpy as jnp
from jax.experimental import pallas as pl
from jax.experimental.pallas import tpu as pltpu


_SPLIT = 2                      # leading "parallel" grid axis (megacore on v7x)
_BLOCK_BUDGET_BYTES = 1 << 20   # target size of one input block (per buffer)


def _tv_kernel(x_ref, htv_ref, wtv_ref, acc_h, acc_w, *, plane_h):
    """One grid step: accumulate squared H/W differences of a (P*H, W) block."""
    i = pl.program_id(1)                      # reduction ("arbitrary") axis

    @pl.when(i == 0)
    def _init():
        acc_h[...] = jnp.zeros_like(acc_h)
        acc_w[...] = jnp.zeros_like(acc_w)

    # Keep the HBM->VMEM DMA in the input's native dtype; upcast in-register.
    x = x_ref[...].astype(jnp.float32)        # (P*H, W), P whole planes

    # Vertical differences: row r of dh is x[r+1] - x[r].  Rows whose local
    # index is the last row of a plane would mix two different planes, so they
    # are masked out (this also neutralizes zero-padded planes at the end).
    dh = x[1:, :] - x[:-1, :]                                   # (P*H-1, W)
    row = jax.lax.broadcasted_iota(jnp.int32, dh.shape, 0)
    dh = jnp.where(row % plane_h != plane_h - 1, dh, 0.0)

    # Horizontal differences never cross plane boundaries.
    dw = x[:, 1:] - x[:, :-1]                                   # (P*H, W-1)

    # Pure element-wise (VPU) accumulation -- no cross-lane reduce per step.
    acc_h[...] += dh * dh
    acc_w[...] += dw * dw

    # Deferred full reduction + single store, only on the last step.
    @pl.when(i == pl.num_programs(1) - 1)
    def _finalize():
        htv_ref[...] = jnp.sum(acc_h[...], keepdims=True)
        wtv_ref[...] = jnp.sum(acc_w[...], keepdims=True)


def tv_loss(x, tv_loss_weight: float = 1.0):
    """Exact equivalent of TVLoss.forward for an NCHW tensor."""
    n, c, h, w = x.shape
    assert h >= 2 and w >= 2, "TVLoss needs at least 2 rows and 2 columns"

    planes = n * c
    itemsize = jnp.dtype(x.dtype).itemsize
    plane_bytes = h * w * itemsize

    # Planes per grid step: as many as fit the block budget, rounded so the
    # block's sublane extent (p * h) is a multiple of 8, and no more than each
    # parallel split actually needs.
    # TODO(synk): very large planes (H*W*itemsize >> budget) would need H
    # tiling with a 1-row halo instead of whole-plane blocks.
    p_unit = 8 // math.gcd(h, 8)
    p = max(1, _BLOCK_BUDGET_BYTES // plane_bytes) // p_unit * p_unit
    p = max(p, p_unit)
    p_cap = -(-planes // _SPLIT)                       # ceil(planes / SPLIT)
    p_cap = -(-p_cap // p_unit) * p_unit
    p = min(p, p_cap)

    per = _SPLIT * p
    planes_pad = -(-planes // per) * per
    steps = planes_pad // per
    th = p * h                                         # rows per input block

    # Flat 2-D row-major view; zero-pad whole planes (they contribute 0).
    x2 = x.reshape(planes * h, w)
    if planes_pad != planes:
        x2 = jnp.pad(x2, ((0, (planes_pad - planes) * h), (0, 0)))

    block_bytes = th * w * itemsize
    in_spec_kwargs = {}
    if steps >= 3 and block_bytes <= (512 * 1024):
        # DMA-bound loop with small per-step blocks: deepen the prefetch.
        in_spec_kwargs["pipeline_mode"] = pl.Buffered(3)
    in_spec = pl.BlockSpec((th, w), lambda s, i: (s * steps + i, 0),
                           **in_spec_kwargs)

    kernel = functools.partial(_tv_kernel, plane_h=h)

    htv_parts, wtv_parts = pl.pallas_call(
        kernel,
        out_shape=(
            jax.ShapeDtypeStruct((_SPLIT, 1, 1), jnp.float32),
            jax.ShapeDtypeStruct((_SPLIT, 1, 1), jnp.float32),
        ),
        grid_spec=pltpu.PrefetchScalarGridSpec(
            num_scalar_prefetch=0,
            grid=(_SPLIT, steps),
            in_specs=[in_spec],
            out_specs=[
                pl.BlockSpec((None, 1, 1), lambda s, i: (s, 0, 0)),
                pl.BlockSpec((None, 1, 1), lambda s, i: (s, 0, 0)),
            ],
            scratch_shapes=[
                pltpu.VMEM((th - 1, w), jnp.float32),   # h_tv partials
                pltpu.VMEM((th, w - 1), jnp.float32),   # w_tv partials
            ],
        ),
        compiler_params=pltpu.CompilerParams(
            dimension_semantics=("parallel", "arbitrary"),
            vmem_limit_bytes=32 * 1024 * 1024,
        ),
    )(x2)

    h_tv = jnp.sum(htv_parts)
    w_tv = jnp.sum(wtv_parts)
    count_h = c * (h - 1) * w
    count_w = c * h * (w - 1)
    return tv_loss_weight * 2.0 * (h_tv / count_h + w_tv / count_w) / n


def _tv_loss_ref(x, tv_loss_weight: float = 1.0):
    # Pure-JAX reference mirroring the PyTorch module, for verification.
    n, c, h, w = x.shape
    count_h = c * (h - 1) * w
    count_w = c * h * (w - 1)
    h_tv = jnp.sum((x[:, :, 1:, :] - x[:, :, : h - 1, :]) ** 2)
    w_tv = jnp.sum((x[:, :, :, 1:] - x[:, :, :, : w - 1]) ** 2)
    return tv_loss_weight * 2.0 * (h_tv / count_h + w_tv / count_w) / n


if __name__ == "__main__":
    key = jax.random.PRNGKey(0)

    x = jax.random.normal(key, (2, 4, 16, 16), dtype=jnp.float32)
    out = jax.block_until_ready(tv_loss(x, tv_loss_weight=1.0))
    ref = _tv_loss_ref(x, tv_loss_weight=1.0)
    assert jnp.allclose(out, ref, rtol=1e-5, atol=1e-5), (out, ref)

    # Exercise the plane-padding path (planes not divisible by SPLIT * P).
    x2 = jax.random.normal(jax.random.PRNGKey(1), (1, 3, 16, 16), jnp.float32)
    out2 = jax.block_until_ready(tv_loss(x2, tv_loss_weight=0.5))
    ref2 = _tv_loss_ref(x2, tv_loss_weight=0.5)
    assert jnp.allclose(out2, ref2, rtol=1e-5, atol=1e-5), (out2, ref2)

    print("KERNEL_OK")
</pallas_src>

<mosaic_0001>
module attributes {stable_mosaic.version = 11 : i64} {
  func.func @_tv_kernel(%arg0: i32, %arg1: i32, %arg2: memref<64x16xf32, #tpu.memory_space<vmem>>, %arg3: memref<1x1x1xf32, #tpu.memory_space<vmem>>, %arg4: memref<1x1x1xf32, #tpu.memory_space<vmem>>, %arg5: memref<63x16xf32, #tpu.memory_space<vmem>>, %arg6: memref<64x15xf32, #tpu.memory_space<vmem>>) attributes {dimension_semantics = [#tpu.dimension_semantics<parallel>, #tpu.dimension_semantics<arbitrary>], iteration_bounds = array<i64: 2, 1>, scalar_prefetch = 0 : i64, scratch_operands = 2 : i64, tpu.core_type = #tpu.core_type<tc>, window_params = [{transform_indices = @transform_0, window_bounds = array<i64: 64, 16>}, {transform_indices = @transform_1, window_bounds = array<i64: 1, 1, 1>}, {transform_indices = @transform_2, window_bounds = array<i64: 1, 1, 1>}]} {
    %c0_i32 = arith.constant 0 : i32
    %0 = arith.cmpi eq, %arg1, %c0_i32 : i32
    %1 = arith.extui %0 : i1 to i32
    %c0_i32_0 = arith.constant 0 : i32
    %2 = arith.cmpi ne, %1, %c0_i32_0 : i32
    scf.if %2 {
      %cst_16 = arith.constant 0.000000e+00 : f32
      %42 = vector.broadcast %cst_16 : f32 to vector<63x16xf32>
      %c0_17 = arith.constant 0 : index
      %c0_18 = arith.constant 0 : index
      %43 = vector.load %arg5[%c0_17, %c0_18] : memref<63x16xf32, #tpu.memory_space<vmem>>, vector<63x16xf32>
      tpu.vector_store %arg5[%c0_17, %c0_18], %42 {strides = array<i32>} : memref<63x16xf32, #tpu.memory_space<vmem>>, vector<63x16xf32>,
      %cst_19 = arith.constant 0.000000e+00 : f32
      %44 = vector.broadcast %cst_19 : f32 to vector<64x15xf32>
      %c0_20 = arith.constant 0 : index
      %c0_21 = arith.constant 0 : index
      %45 = vector.load %arg6[%c0_20, %c0_21] : memref<64x15xf32, #tpu.memory_space<vmem>>, vector<64x15xf32>
      tpu.vector_store %arg6[%c0_20, %c0_21], %44 {strides = array<i32>} : memref<64x15xf32, #tpu.memory_space<vmem>>, vector<64x15xf32>,
    } else {
    }
    %c0 = arith.constant 0 : index
    %c0_1 = arith.constant 0 : index
    %3 = vector.load %arg2[%c0, %c0_1] : memref<64x16xf32, #tpu.memory_space<vmem>>, vector<64x16xf32>
    %4 = vector.extract_strided_slice %3 {offsets = [1, 0], sizes = [63, 16], strides = [1, 1]} : vector<64x16xf32> to vector<63x16xf32>
    %5 = vector.extract_strided_slice %3 {offsets = [0, 0], sizes = [63, 16], strides = [1, 1]} : vector<64x16xf32> to vector<63x16xf32>
    %6 = arith.subf %4, %5 : vector<63x16xf32>
    %7 = tpu.iota {dimensions = array<i32: 0>} : vector<63x16xi32>
    %c16_i32 = arith.constant 16 : i32
    %c0_i32_2 = arith.constant 0 : i32
    %8 = arith.cmpi eq, %c16_i32, %c0_i32_2 : i32
    %c1_i32 = arith.constant 1 : i32
    %9 = arith.select %8, %c1_i32, %c16_i32 : i32
    %10 = vector.broadcast %9 : i32 to vector<63x16xi32>
    %11 = arith.remsi %7, %10 : vector<63x16xi32>
    %c0_i32_3 = arith.constant 0 : i32
    %12 = vector.broadcast %c0_i32_3 : i32 to vector<63x16xi32>
    %13 = arith.cmpi ne, %11, %12 : vector<63x16xi32>
    %c0_i32_4 = arith.constant 0 : i32
    %14 = vector.broadcast %c0_i32_4 : i32 to vector<63x16xi32>
    %15 = arith.cmpi slt, %11, %14 : vector<63x16xi32>
    %c0_i32_5 = arith.constant 0 : i32
    %16 = arith.cmpi slt, %9, %c0_i32_5 : i32
    %17 = vector.broadcast %16 : i1 to vector<63x16xi1>
    %18 = vector.broadcast %17 : vector<63x16xi1> to vector<63x16xi1>
    %19 = arith.xori %15, %18 : vector<63x16xi1>
    %20 = arith.andi %19, %13 : vector<63x16xi1>
    %21 = vector.broadcast %9 : i32 to vector<63x16xi32>
    %22 = arith.addi %11, %21 : vector<63x16xi32>
    %23 = arith.select %20, %22, %11 : vector<63x16xi1>, vector<63x16xi32>
    %c15_i32 = arith.constant 15 : i32
    %24 = vector.broadcast %c15_i32 : i32 to vector<63x16xi32>
    %25 = arith.cmpi ne, %23, %24 : vector<63x16xi32>
    %cst = arith.constant 0.000000e+00 : f32
    %26 = vector.broadcast %cst : f32 to vector<63x16xf32>
    %27 = arith.select %25, %6, %26 : vector<63x16xi1>, vector<63x16xf32>
    %28 = vector.extract_strided_slice %3 {offsets = [0, 1], sizes = [64, 15], strides = [1, 1]} : vector<64x16xf32> to vector<64x15xf32>
    %29 = vector.extract_strided_slice %3 {offsets = [0, 0], sizes = [64, 15], strides = [1, 1]} : vector<64x16xf32> to vector<64x15xf32>
    %30 = arith.subf %28, %29 : vector<64x15xf32>
    %c0_6 = arith.constant 0 : index
    %c0_7 = arith.constant 0 : index
    %31 = vector.load %arg5[%c0_6, %c0_7] : memref<63x16xf32, #tpu.memory_space<vmem>>, vector<63x16xf32>
    %32 = arith.mulf %27, %27 : vector<63x16xf32>
    %33 = arith.addf %31, %32 : vector<63x16xf32>
    %c0_8 = arith.constant 0 : index
    %c0_9 = arith.constant 0 : index
    %34 = vector.load %arg5[%c0_8, %c0_9] : memref<63x16xf32, #tpu.memory_space<vmem>>, vector<63x16xf32>
    tpu.vector_store %arg5[%c0_8, %c0_9], %33 {strides = array<i32>} : memref<63x16xf32, #tpu.memory_space<vmem>>, vector<63x16xf32>,
    %c0_10 = arith.constant 0 : index
    %c0_11 = arith.constant 0 : index
    %35 = vector.load %arg6[%c0_10, %c0_11] : memref<64x15xf32, #tpu.memory_space<vmem>>, vector<64x15xf32>
    %36 = arith.mulf %30, %30 : vector<64x15xf32>
    %37 = arith.addf %35, %36 : vector<64x15xf32>
    %c0_12 = arith.constant 0 : index
    %c0_13 = arith.constant 0 : index
    %38 = vector.load %arg6[%c0_12, %c0_13] : memref<64x15xf32, #tpu.memory_space<vmem>>, vector<64x15xf32>
    tpu.vector_store %arg6[%c0_12, %c0_13], %37 {strides = array<i32>} : memref<64x15xf32, #tpu.memory_space<vmem>>, vector<64x15xf32>,
    %c0_i32_14 = arith.constant 0 : i32
    %39 = arith.cmpi eq, %arg1, %c0_i32_14 : i32
    %40 = arith.extui %39 : i1 to i32
    %c0_i32_15 = arith.constant 0 : i32
    %41 = arith.cmpi ne, %40, %c0_i32_15 : i32
    scf.if %41 {
      %c0_16 = arith.constant 0 : index
      %c0_17 = arith.constant 0 : index
      %42 = vector.load %arg5[%c0_16, %c0_17] : memref<63x16xf32, #tpu.memory_space<vmem>>, vector<63x16xf32>
      %43 = vector.shape_cast %42 : vector<63x16xf32> to vector<1x63x16xf32>
      %cst_18 = arith.constant dense<0.000000e+00> : vector<1xf32>
      %44 = vector.multi_reduction <add>, %43, %cst_18 [1, 2] : vector<1x63x16xf32> to vector<1xf32>
      %45 = vector.shape_cast %44 : vector<1xf32> to vector<1x1x1xf32>
      %46 = vector.extract %45[0, 0, 0] : f32 from vector<1x1x1xf32>
      %47 = vector.broadcast %46 : f32 to vector<1x1xf32>
      %c0_19 = arith.constant 0 : index
      %c0_20 = arith.constant 0 : index
      %c0_21 = arith.constant 0 : index
      %48 = vector.load %arg3[%c0_19, %c0_20, %c0_21] : memref<1x1x1xf32, #tpu.memory_space<vmem>>, vector<1x1x1xf32>
      %49 = vector.shape_cast %48 : vector<1x1x1xf32> to vector<1x1xf32>
      %50 = vector.shape_cast %47 : vector<1x1xf32> to vector<1x1x1xf32>
      tpu.vector_store %arg3[%c0_19, %c0_20, %c0_21], %50 {strides = array<i32>} : memref<1x1x1xf32, #tpu.memory_space<vmem>>, vector<1x1x1xf32>,
      %c0_22 = arith.constant 0 : index
      %c0_23 = arith.constant 0 : index
      %51 = vector.load %arg6[%c0_22, %c0_23] : memref<64x15xf32, #tpu.memory_space<vmem>>, vector<64x15xf32>
      %52 = vector.shape_cast %51 : vector<64x15xf32> to vector<1x64x15xf32>
      %cst_24 = arith.constant dense<0.000000e+00> : vector<1xf32>
      %53 = vector.multi_reduction <add>, %52, %cst_24 [1, 2] : vector<1x64x15xf32> to vector<1xf32>
      %54 = vector.shape_cast %53 : vector<1xf32> to vector<1x1x1xf32>
      %55 = vector.extract %54[0, 0, 0] : f32 from vector<1x1x1xf32>
      %56 = vector.broadcast %55 : f32 to vector<1x1xf32>
      %c0_25 = arith.constant 0 : index
      %c0_26 = arith.constant 0 : index
      %c0_27 = arith.constant 0 : index
      %57 = vector.load %arg4[%c0_25, %c0_26, %c0_27] : memref<1x1x1xf32, #tpu.memory_space<vmem>>, vector<1x1x1xf32>
      %58 = vector.shape_cast %57 : vector<1x1x1xf32> to vector<1x1xf32>
      %59 = vector.shape_cast %56 : vector<1x1xf32> to vector<1x1x1xf32>
      tpu.vector_store %arg4[%c0_25, %c0_26, %c0_27], %59 {strides = array<i32>} : memref<1x1x1xf32, #tpu.memory_space<vmem>>, vector<1x1x1xf32>,
    } else {
    }
    return
  }
  func.func @transform_0(%arg0: i32, %arg1: i32) -> (i32, i32) {
    %c1_i32 = arith.constant 1 : i32
    %0 = arith.muli %arg0, %c1_i32 : i32
    %1 = arith.addi %0, %arg1 : i32
    %c0_i32 = arith.constant 0 : i32
    %c0_i32_0 = arith.constant 0 : i32
    return %1, %c0_i32 : i32, i32
  }
  func.func @transform_1(%arg0: i32, %arg1: i32) -> (i32, i32, i32) {
    %c0_i32 = arith.constant 0 : i32
    %c0_i32_0 = arith.constant 0 : i32
    %c0_i32_1 = arith.constant 0 : i32
    return %arg0, %c0_i32, %c0_i32_0 : i32, i32, i32
  }
  func.func @transform_2(%arg0: i32, %arg1: i32) -> (i32, i32, i32) {
    %c0_i32 = arith.constant 0 : i32
    %c0_i32_0 = arith.constant 0 : i32
    %c0_i32_1 = arith.constant 0 : i32
    return %arg0, %c0_i32, %c0_i32_0 : i32, i32, i32
  }
}

</mosaic_0001>

<llo_original>
// kernel: tpu_custom_call.1
$region0: #{tpu_custom_call.1}
  #allocation0 [shape = 'u32[]', space=smem, size = 0x4, offset = 0x4, fixed_abs, tag = 'smem constant byte address 0x4 - core index']
  #allocation1 [shape = 'u32[144,128]{1,0:T(1,128)}', space=vmem, size = 0x12000, scoped, tag = 'internal scratch']
  #allocation2 [shape = 'f32[63,16]{1,0:T(8,128)}', space=vmem, size = 0x8000, scoped, tag = 'scratch operand']
  #allocation3 [shape = 'f32[64,15]{1,0:T(8,128)}', space=vmem, size = 0x8000, scoped, tag = 'scratch operand']
  %s0 = inlined_call_operand.vmem [shape: f32[128,16], index: 0, kind: input, shape index: {}]
  %s1 = inlined_call_operand.vmem [shape: f32[2,1,1], index: 1, kind: output, shape index: {0}]
  %s2 = inlined_call_operand.vmem [shape: f32[2,1,1], index: 2, kind: output, shape index: {1}]
  %3 = xla_tuple %s1, %s2
  %s4 = sld [smem:[#allocation0]]
  $region53: #{tpu_custom_call.1} parent=0
    _
  %s6 = ssub.s32 1, %s4
  %s7 = scalar_select 0, %s6, %s4
  loop: start=0, step=1, limit=4
  $region2: #{tpu_custom_call.1} parent=0 // loop_pre_header
    _
  $region3: #{tpu_custom_call.1} parent=0 // loop_header
    %s9 = sphi 0, %s13
    %p10 = scmp.ge.s32.totalorder %s9, 4
    %s16 = sphi 0, %s28
    %s17 = sphi 0, %s24
    %s18 = sphi 0, %s16
    %s19 = sphi 0, %s17
    %s20 = sphi 0, %s18
    %s21 = sphi 0, %s19
    %s33 = sphi 0, %s35
    %s36 = sphi 0, %s33
    %s37 = sphi 0, %s36
    %s53 = sphi 0, %s37
    %s59 = sphi 0, %s61
    %s62 = sphi 0, %s59
    %s63 = sphi 0, %s62
    %s79 = sphi 0, %s63
    %s85 = sphi 0, %s87
    %s88 = sphi 0, %s85
    %s89 = sphi 0, %s88
    %s105 = sphi 0, %s89
  $region4: #{tpu_custom_call.1} parent=0 // loop_header_branch
    %12 = sbr.rel (%p10) target = $region8
  $region5: #{tpu_custom_call.1} parent=0 // loop_body
    %s14 = ssub.s32 %s9, 1
    %s15 = ssub.s32 %s9, 2
    %s22 = sadd.s32 1, %s17
    %p23 = scmp.ge.s32.totalorder %s22, 1
    %s24 = scalar_select %p23, 0, %s22
    %s25 = sadd.s32 1, %s16
    %s26 = scalar_select %p23, %s25, %s16
    %p27 = scmp.ge.s32.totalorder %s26, 2
    %s28 = scalar_select %p27, 0, %s26
    %s29 = sadd.s32 %s16, %s17
    %s30 = sadd.s32 %s28, %s24
    %s31 = ssub.s32 %s29, %s30
    %p32 = scmp.eq.s32.totalorder %s31, 0
    %s34 = sadd.s32 %s33, 1
    %s35 = scalar_select %p32, %s33, %s34
    %p38 = pneg %p32
    %p39 = scmp.eq.s32.totalorder %s9, 1
    %p40 = por %p38, %p39
    %p41 = scmp.ne.s32.totalorder %s33, %s36
    %p42 = scmp.eq.s32.totalorder %s9, 0
    %p43 = por %p41, %p42
    %p44 = scmp.ne.s32.totalorder %s33, %s36
    %p45 = scmp.eq.s32.totalorder %s14, 1
    %p46 = por %p44, %p45
    %p47 = scmp.ne.s32.totalorder %s36, %s37
    %p48 = scmp.eq.s32.totalorder %s14, 0
    %p49 = por %p47, %p48
    %p50 = scmp.ne.s32.totalorder %s36, %s37
    %p51 = scmp.eq.s32.totalorder %s15, 1
    %p52 = por %p50, %p51
    %p54 = scmp.ne.s32.totalorder %s37, %s53
    %p55 = scmp.eq.s32.totalorder %s15, 0
    %p56 = por %p54, %p55
    %s57 = ssub.s32 %s16, %s28
    %p58 = scmp.eq.s32.totalorder %s57, 0
    %s60 = sadd.s32 %s59, 1
    %s61 = scalar_select %p58, %s59, %s60
    %p64 = pneg %p58
    %p65 = scmp.eq.s32.totalorder %s9, 1
    %p66 = por %p64, %p65
    %p67 = scmp.ne.s32.totalorder %s59, %s62
    %p68 = scmp.eq.s32.totalorder %s9, 0
    %p69 = por %p67, %p68
    %p70 = scmp.ne.s32.totalorder %s59, %s62
    %p71 = scmp.eq.s32.totalorder %s14, 1
    %p72 = por %p70, %p71
    %p73 = scmp.ne.s32.totalorder %s62, %s63
    %p74 = scmp.eq.s32.totalorder %s14, 0
    %p75 = por %p73, %p74
    %p76 = scmp.ne.s32.totalorder %s62, %s63
    %p77 = scmp.eq.s32.totalorder %s15, 1
    %p78 = por %p76, %p77
    %p80 = scmp.ne.s32.totalorder %s63, %s79
    %p81 = scmp.eq.s32.totalorder %s15, 0
    %p82 = por %p80, %p81
    %s83 = ssub.s32 %s16, %s28
    %p84 = scmp.eq.s32.totalorder %s83, 0
    %s86 = sadd.s32 %s85, 1
    %s87 = scalar_select %p84, %s85, %s86
    %p90 = pneg %p84
    %p91 = scmp.eq.s32.totalorder %s9, 1
    %p92 = por %p90, %p91
    %p93 = scmp.ne.s32.totalorder %s85, %s88
    %p94 = scmp.eq.s32.totalorder %s9, 0
    %p95 = por %p93, %p94
    %p96 = scmp.ne.s32.totalorder %s85, %s88
    %p97 = scmp.eq.s32.totalorder %s14, 1
    %p98 = por %p96, %p97
    %p99 = scmp.ne.s32.totalorder %s88, %s89
    %p100 = scmp.eq.s32.totalorder %s14, 0
    %p101 = por %p99, %p100
    %p102 = scmp.ne.s32.totalorder %s88, %s89
    %p103 = scmp.eq.s32.totalorder %s15, 1
    %p104 = por %p102, %p103
    %p106 = scmp.ne.s32.totalorder %s89, %s105
    %p107 = scmp.eq.s32.totalorder %s15, 0
    %p108 = por %p106, %p107
    %p109 = scmp.le.s32.totalorder 1, %s9
    %p110 = scmp.lt.s32.totalorder %s9, 3
    %p111 = pnand %p109, %p110
    %p112 = pneg %p111
    // Predicated region
    $region9: #{tpu_custom_call.1} parent=5 // pred_check
      _
    $region10: #{tpu_custom_call.1} parent=5 // pred_check_branch
      %114 = sbr.rel (%p111) target = $region12
    $region11: #{tpu_custom_call.1} parent=5 // pred_region
      %s115 = ssub.s32 %s9, 1
    $region12: #{tpu_custom_call.1} parent=5 // pred_fallthru
      _
    %p116 = scmp.lt.s32.totalorder %s9, 2
    // Predicated region
    $region13: #{tpu_custom_call.1} parent=5 // pred_check
      %p117 = pneg %p116
    $region14: #{tpu_custom_call.1} parent=5 // pred_check_branch
      %119 = sbr.rel (%p117) target = $region16
    $region15: #{tpu_custom_call.1} parent=5 // pred_region
      // Predicated region
      $region17: #{tpu_custom_call.1} parent=15 // pred_check
        %p120 = pneg %p43
      $region18: #{tpu_custom_call.1} parent=15 // pred_check_branch
        %122 = sbr.rel (%p120) target = $region20
      $region19: #{tpu_custom_call.1} parent=15 // pred_region
        %s123 = sadd.s32 %s16, %s17
        %s124 = smul.u32 8, %s123
        %p125 = scmp.lt.s32.totalorder %s124, 15
        %s126 = scalar_select %p125, %s124, 15
        %s127 = smul.addr %s126, 8
        %s128 = scalar_lea.vmem %s0, %s127
        %s129 = sadd.s32 %s16, %s17
        %s130 = smul.u32 8, %s129
      $region20: #{tpu_custom_call.1} parent=15 // pred_fallthru
        _
    $region16: #{tpu_custom_call.1} parent=5 // pred_fallthru
      _
    %p131 = scmp.le.s32.totalorder 1, %s9
    %p132 = scmp.lt.s32.totalorder %s9, 3
    %p133 = pnand %p131, %p132
    %p134 = pneg %p133
    // Predicated region
    $region21: #{tpu_custom_call.1} parent=5 // pred_check
      _
    $region22: #{tpu_custom_call.1} parent=5 // pred_check_branch
      %136 = sbr.rel (%p133) target = $region24
    $region23: #{tpu_custom_call.1} parent=5 // pred_region
      %s137 = ssub.s32 %s9, 1
      %s138 = sadd.s32 %s18, %s19
      %s139 = smul.u32 8, %s138
      %p140 = scmp.lt.s32.totalorder %s139, 15
      %s141 = scalar_select %p140, %s139, 15
      %s142 = smul.addr %s141, 8
      %s143 = scalar_lea.vmem %s0, %s142
      %p144 = pneg %p49
      %p145 = pneg %p46
      %p146 = pneg %p75
      %p147 = pneg %p72
      %p148 = scmp.lt.s32.totalorder %s18, 1
      %s149 = scalar_select %p148, %s18, 1
      %s150 = scalar_lea.vmem %s1, %s149
      %p151 = pneg %p101
      %p152 = pneg %p98
      %p153 = scmp.lt.s32.totalorder %s18, 1
      %s154 = scalar_select %p153, %s18, 1
      %s155 = scalar_lea.vmem %s2, %s154
      %s156 = sadd.s32 %s18, %s19
      %s157 = smul.u32 8, %s156
      %p158 = scmp.lt.s32.totalorder %s157, 15
      %s159 = scalar_select %p158, %s157, 15
      %s160 = smul.addr %s159, 8
      %s161 = scalar_lea.vmem %s0, %s160
      %s162 = sadd.s32 %s18, %s19
      %s163 = smul.u32 8, %s162
      %p164 = scmp.lt.s32.totalorder %s18, 1
      %s165 = scalar_select %p164, %s18, 1
      %s166 = scalar_lea.vmem %s1, %s165
      %p167 = scmp.lt.s32.totalorder %s18, 1
      %s168 = scalar_select %p167, %s18, 1
      %s169 = scalar_lea.vmem %s2, %s168
      %p170 = scmp.eq.s32.totalorder %s19, 0
      // Predicated region
      $region25: #{tpu_custom_call.1} parent=23 // pred_check
        %p171 = pneg %p170
      $region26: #{tpu_custom_call.1} parent=23 // pred_check_branch
        %173 = sbr.rel (%p171) target = $region28
      $region27: #{tpu_custom_call.1} parent=23 // pred_region
        %vm174 = vcmask 130048
        %175 = vst.msk [vmem:[#allocation2] sm:$0xff] %vm174, 0.0
        %176 = vst.msk [vmem:[#allocation2 + $0x8] sm:$0xff] %vm174, 0.0
        %177 = vst.msk [vmem:[#allocation2 + $0x10] sm:$0xff] %vm174, 0.0
        %178 = vst.msk [vmem:[#allocation2 + $0x18] sm:$0xff] %vm174, 0.0
        %179 = vst.msk [vmem:[#allocation2 + $0x20] sm:$0xff] %vm174, 0.0
        %180 = vst.msk [vmem:[#allocation2 + $0x28] sm:$0xff] %vm174, 0.0
        %181 = vst.msk [vmem:[#allocation2 + $0x30] sm:$0xff] %vm174, 0.0
        %vm182 = vcmask 129024
        %183 = vst.msk [vmem:[#allocation2 + $0x38] sm:$0x7f] %vm182, 0.0
        %vm184 = vcmask 121856
        %185 = vst.msk [vmem:[#allocation3] sm:$0xff] %vm184, 0.0
        %186 = vst.msk [vmem:[#allocation3 + $0x8] sm:$0xff] %vm184, 0.0
        %187 = vst.msk [vmem:[#allocation3 + $0x10] sm:$0xff] %vm184, 0.0
        %188 = vst.msk [vmem:[#allocation3 + $0x18] sm:$0xff] %vm184, 0.0
        %189 = vst.msk [vmem:[#allocation3 + $0x20] sm:$0xff] %vm184, 0.0
        %190 = vst.msk [vmem:[#allocation3 + $0x28] sm:$0xff] %vm184, 0.0
        %191 = vst.msk [vmem:[#allocation3 + $0x30] sm:$0xff] %vm184, 0.0
        %192 = vst.msk [vmem:[#allocation3 + $0x38] sm:$0xff] %vm184, 0.0
      $region28: #{tpu_custom_call.1} parent=23 // pred_fallthru
        _
      %v193 = vld [vmem:[%s161] sm:$0xff]
      %v194 = vld [vmem:[%s161 + $0x8] sm:$0xff]
      %v195 = vld [vmem:[%s161 + $0x10] sm:$0xff]
      %v196 = vld [vmem:[%s161 + $0x18] sm:$0xff]
      %v197 = vld [vmem:[%s161 + $0x20] sm:$0xff]
      %v198 = vld [vmem:[%s161 + $0x28] sm:$0xff]
      %v199 = vld [vmem:[%s161 + $0x30] sm:$0xff]
      %v200 = vld [vmem:[%s161 + $0x38] sm:$0xff]
      %vm209 = vcmask 1040384
      %v210 = vrot.slane %v193, 7
      %v211 = vrot.slane %v194, 7
      %v212 = vsel %vm209, %v210, %v211
      %v213 = vrot.slane %v195, 7
      %v214 = vsel %vm209, %v211, %v213
      %v215 = vrot.slane %v196, 7
      %v216 = vsel %vm209, %v213, %v215
      %v217 = vrot.slane %v197, 7
      %v218 = vsel %vm209, %v215, %v217
      %v219 = vrot.slane %v198, 7
      %v220 = vsel %vm209, %v217, %v219
      %v221 = vrot.slane %v199, 7
      %v222 = vsel %vm209, %v219, %v221
      %v223 = vrot.slane %v200, 7
      %v224 = vsel %vm209, %v221, %v223
      %v233 = vsub.f32 %v193, %v210
      %v234 = vsub.f32 %v194, %v212
      %v235 = vsub.f32 %v195, %v214
      %v236 = vsub.f32 %v196, %v216
      %v237 = vsub.f32 %v197, %v218
      %v238 = vsub.f32 %v198, %v220
      %v239 = vsub.f32 %v199, %v222
      %v240 = vsub.f32 %v200, %v224
      %v241 = vlaneseq
      %v242 = vshrl.u32 %v241, 7
      %v243 = vadd.s32 %v242, 8
      %v244 = vadd.s32 %v242, 16
      %v245 = vadd.s32 %v242, 24
      %v246 = vadd.s32 %v242, 32
      %v247 = vadd.s32 %v242, 40
      %v248 = vadd.s32 %v242, 48
      %v249 = vadd.s32 %v242, 56
      %vm250 = vcmp.lt.s32.totalorder %v242, 0
      %v251 = vsub.s32 0, %v242
      %v252 = vsel %vm250, %v251, %v242
      %v253 = vshrl.u32 %v252, 4
      %v254 = vand.u32 %v252, 15
      %v255 = vsub.s32 0, %v254
      %v256 = vsel %vm250, %v255, %v254
      %vm257 = vcmp.lt.s32.totalorder %v243, 0
      %v258 = vsub.s32 0, %v243
      %v259 = vsel %vm257, %v258, %v243
      %v260 = vshrl.u32 %v259, 4
      %v261 = vand.u32 %v259, 15
      %v262 = vsub.s32 0, %v261
      %v263 = vsel %vm257, %v262, %v261
      %vm264 = vcmp.lt.s32.totalorder %v244, 0
      %v265 = vsub.s32 0, %v244
      %v266 = vsel %vm264, %v265, %v244
      %v267 = vshrl.u32 %v266, 4
      %v268 = vand.u32 %v266, 15
      %v269 = vsub.s32 0, %v268
      %v270 = vsel %vm264, %v269, %v268
      %vm271 = vcmp.lt.s32.totalorder %v245, 0
      %v272 = vsub.s32 0, %v245
      %v273 = vsel %vm271, %v272, %v245
      %v274 = vshrl.u32 %v273, 4
      %v275 = vand.u32 %v273, 15
      %v276 = vsub.s32 0, %v275
      %v277 = vsel %vm271, %v276, %v275
      %vm278 = vcmp.lt.s32.totalorder %v246, 0
      %v279 = vsub.s32 0, %v246
      %v280 = vsel %vm278, %v279, %v246
      %v281 = vshrl.u32 %v280, 4
      %v282 = vand.u32 %v280, 15
      %v283 = vsub.s32 0, %v282
      %v284 = vsel %vm278, %v283, %v282
      %vm285 = vcmp.lt.s32.totalorder %v247, 0
      %v286 = vsub.s32 0, %v247
      %v287 = vsel %vm285, %v286, %v247
      %v288 = vshrl.u32 %v287, 4
      %v289 = vand.u32 %v287, 15
      %v290 = vsub.s32 0, %v289
      %v291 = vsel %vm285, %v290, %v289
      %vm292 = vcmp.lt.s32.totalorder %v248, 0
      %v293 = vsub.s32 0, %v248
      %v294 = vsel %vm292, %v293, %v248
      %v295 = vshrl.u32 %v294, 4
      %v296 = vand.u32 %v294, 15
      %v297 = vsub.s32 0, %v296
      %v298 = vsel %vm292, %v297, %v296
      %vm299 = vcmp.lt.s32.totalorder %v249, 0
      %v300 = vsub.s32 0, %v249
      %v301 = vsel %vm299, %v300, %v249
      %v302 = vshrl.u32 %v301, 4
      %v303 = vand.u32 %v301, 15
      %v304 = vsub.s32 0, %v303
      %v305 = vsel %vm299, %v304, %v303
      %vm306 = vcmp.ne.s32.totalorder %v256, 0
      %vm307 = vcmp.ne.s32.totalorder %v263, 0
      %vm308 = vcmp.ne.s32.totalorder %v270, 0
      %vm309 = vcmp.ne.s32.totalorder %v277, 0
      %vm310 = vcmp.ne.s32.totalorder %v284, 0
      %vm311 = vcmp.ne.s32.totalorder %v291, 0
      %vm312 = vcmp.ne.s32.totalorder %v298, 0
      %vm313 = vcmp.ne.s32.totalorder %v305, 0
      %vm314 = vcmp.lt.s32.totalorder %v256, 0
      %vm315 = vcmp.lt.s32.totalorder %v263, 0
      %vm316 = vcmp.lt.s32.totalorder %v270, 0
      %vm317 = vcmp.lt.s32.totalorder %v277, 0
      %vm318 = vcmp.lt.s32.totalorder %v284, 0
      %vm319 = vcmp.lt.s32.totalorder %v291, 0
      %vm320 = vcmp.lt.s32.totalorder %v298, 0
      %vm321 = vcmp.lt.s32.totalorder %v305, 0
      %vm322 = vmand %vm314, %vm306
      %vm323 = vmand %vm315, %vm307
      %vm324 = vmand %vm316, %vm308
      %vm325 = vmand %vm317, %vm309
      %vm326 = vmand %vm318, %vm310
      %vm327 = vmand %vm319, %vm311
      %vm328 = vmand %vm320, %vm312
      %vm329 = vmand %vm321, %vm313
      %v330 = vadd.s32 %v256, 16
      %v331 = vadd.s32 %v263, 16
      %v332 = vadd.s32 %v270, 16
      %v333 = vadd.s32 %v277, 16
      %v334 = vadd.s32 %v284, 16
      %v335 = vadd.s32 %v291, 16
      %v336 = vadd.s32 %v298, 16
      %v337 = vadd.s32 %v305, 16
      %v338 = vsel %vm322, %v330, %v256
      %v339 = vsel %vm323, %v331, %v263
      %v340 = vsel %vm324, %v332, %v270
      %v341 = vsel %vm325, %v333, %v277
      %v342 = vsel %vm326, %v334, %v284
      %v343 = vsel %vm327, %v335, %v291
      %v344 = vsel %vm328, %v336, %v298
      %v345 = vsel %vm329, %v337, %v305
      %vm346 = vcmp.ne.s32.totalorder %v338, 15
      %vm347 = vcmp.ne.s32.totalorder %v339, 15
      %vm348 = vcmp.ne.s32.totalorder %v340, 15
      %vm349 = vcmp.ne.s32.totalorder %v341, 15
      %vm350 = vcmp.ne.s32.totalorder %v342, 15
      %vm351 = vcmp.ne.s32.totalorder %v343, 15
      %vm352 = vcmp.ne.s32.totalorder %v344, 15
      %vm353 = vcmp.ne.s32.totalorder %v345, 15
      %vm362 = vcmask 1046528
      %v363 = vrot.slane %v233, 1
      %v364 = vrot.slane %v234, 1
      %v365 = vsel %vm362, %v363, %v364
      %v366 = vrot.slane %v235, 1
      %v367 = vsel %vm362, %v364, %v366
      %v368 = vrot.slane %v236, 1
      %v369 = vsel %vm362, %v366, %v368
      %v370 = vrot.slane %v237, 1
      %v371 = vsel %vm362, %v368, %v370
      %v372 = vrot.slane %v238, 1
      %v373 = vsel %vm362, %v370, %v372
      %v374 = vrot.slane %v239, 1
      %v375 = vsel %vm362, %v372, %v374
      %v376 = vrot.slane %v240, 1
      %v377 = vsel %vm362, %v374, %v376
      %v386 = vsel %vm346, %v365, 0.0
      %v387 = vsel %vm347, %v367, 0.0
      %v388 = vsel %vm348, %v369, 0.0
      %v389 = vsel %vm349, %v371, 0.0
      %v390 = vsel %vm350, %v373, 0.0
      %v391 = vsel %vm351, %v375, 0.0
      %v392 = vsel %vm352, %v377, 0.0
      %v393 = vsel %vm353, %v376, 0.0
      %394 = vrot.lane.b32.xlu0 %v193, 1
      %v395 = vpop.permute.xlu0 %394
      %396 = vrot.lane.b32.xlu0 %v194, 1
      %v397 = vpop.permute.xlu0 %396
      %398 = vrot.lane.b32.xlu0 %v195, 1
      %v399 = vpop.permute.xlu0 %398
      %400 = vrot.lane.b32.xlu0 %v196, 1
      %v401 = vpop.permute.xlu0 %400
      %402 = vrot.lane.b32.xlu0 %v197, 1
      %v403 = vpop.permute.xlu0 %402
      %404 = vrot.lane.b32.xlu0 %v198, 1
      %v405 = vpop.permute.xlu0 %404
      %406 = vrot.lane.b32.xlu0 %v199, 1
      %v407 = vpop.permute.xlu0 %406
      %408 = vrot.lane.b32.xlu0 %v200, 1
      %v409 = vpop.permute.xlu0 %408
      %v418 = vsub.f32 %v193, %v395
      %v419 = vsub.f32 %v194, %v397
      %v420 = vsub.f32 %v195, %v399
      %v421 = vsub.f32 %v196, %v401
      %v422 = vsub.f32 %v197, %v403
      %v423 = vsub.f32 %v198, %v405
      %v424 = vsub.f32 %v199, %v407
      %v425 = vsub.f32 %v200, %v409
      %v426 = vld [vmem:[#allocation2] sm:$0xff]
      %v427 = vld [vmem:[#allocation2 + $0x8] sm:$0xff]
      %v428 = vld [vmem:[#allocation2 + $0x10] sm:$0xff]
      %v429 = vld [vmem:[#allocation2 + $0x18] sm:$0xff]
      %v430 = vld [vmem:[#allocation2 + $0x20] sm:$0xff]
      %v431 = vld [vmem:[#allocation2 + $0x28] sm:$0xff]
      %v432 = vld [vmem:[#allocation2 + $0x30] sm:$0xff]
      %v433 = vld [vmem:[#allocation2 + $0x38] sm:$0x7f]
      %v434 = vmul.f32 %v386, %v386
      %v435 = vmul.f32 %v387, %v387
      %v436 = vmul.f32 %v388, %v388
      %v437 = vmul.f32 %v389, %v389
      %v438 = vmul.f32 %v390, %v390
      %v439 = vmul.f32 %v391, %v391
      %v440 = vmul.f32 %v392, %v392
      %v441 = vmul.f32 %v393, %v393
      %v442 = vadd.f32 %v426, %v434
      %v443 = vadd.f32 %v427, %v435
      %v444 = vadd.f32 %v428, %v436
      %v445 = vadd.f32 %v429, %v437
      %v446 = vadd.f32 %v430, %v438
      %v447 = vadd.f32 %v431, %v439
      %v448 = vadd.f32 %v432, %v440
      %v449 = vadd.f32 %v433, %v441
      %vm450 = vcmask 130048
      %451 = vst.msk [vmem:[#allocation2] sm:$0xff] %vm450, %v442
      %452 = vst.msk [vmem:[#allocation2 + $0x8] sm:$0xff] %vm450, %v443
      %453 = vst.msk [vmem:[#allocation2 + $0x10] sm:$0xff] %vm450, %v444
      %454 = vst.msk [vmem:[#allocation2 + $0x18] sm:$0xff] %vm450, %v445
      %455 = vst.msk [vmem:[#allocation2 + $0x20] sm:$0xff] %vm450, %v446
      %456 = vst.msk [vmem:[#allocation2 + $0x28] sm:$0xff] %vm450, %v447
      %457 = vst.msk [vmem:[#allocation2 + $0x30] sm:$0xff] %vm450, %v448
      %vm458 = vcmask 129024
      %459 = vst.msk [vmem:[#allocation2 + $0x38] sm:$0x7f] %vm458, %v449
      %v460 = vld [vmem:[#allocation3] sm:$0xff]
      %v461 = vld [vmem:[#allocation3 + $0x8] sm:$0xff]
      %v462 = vld [vmem:[#allocation3 + $0x10] sm:$0xff]
      %v463 = vld [vmem:[#allocation3 + $0x18] sm:$0xff]
      %v464 = vld [vmem:[#allocation3 + $0x20] sm:$0xff]
      %v465 = vld [vmem:[#allocation3 + $0x28] sm:$0xff]
      %v466 = vld [vmem:[#allocation3 + $0x30] sm:$0xff]
      %v467 = vld [vmem:[#allocation3 + $0x38] sm:$0xff]
      %v468 = vmul.f32 %v418, %v418
      %v469 = vmul.f32 %v419, %v419
      %v470 = vmul.f32 %v420, %v420
      %v471 = vmul.f32 %v421, %v421
      %v472 = vmul.f32 %v422, %v422
      %v473 = vmul.f32 %v423, %v423
      %v474 = vmul.f32 %v424, %v424
      %v475 = vmul.f32 %v425, %v425
      %484 = vrot.lane.b32.xlu0 %v468, 127
      %v485 = vpop.permute.xlu0 %484
      %486 = vrot.lane.b32.xlu0 %v469, 127
      %v487 = vpop.permute.xlu0 %486
      %488 = vrot.lane.b32.xlu0 %v470, 127
      %v489 = vpop.permute.xlu0 %488
      %490 = vrot.lane.b32.xlu0 %v471, 127
      %v491 = vpop.permute.xlu0 %490
      %492 = vrot.lane.b32.xlu0 %v472, 127
      %v493 = vpop.permute.xlu0 %492
      %494 = vrot.lane.b32.xlu0 %v473, 127
      %v495 = vpop.permute.xlu0 %494
      %496 = vrot.lane.b32.xlu0 %v474, 127
      %v497 = vpop.permute.xlu0 %496
      %498 = vrot.lane.b32.xlu0 %v475, 127
      %v499 = vpop.permute.xlu0 %498
      %v508 = vadd.f32 %v460, %v485
      %v509 = vadd.f32 %v461, %v487
      %v510 = vadd.f32 %v462, %v489
      %v511 = vadd.f32 %v463, %v491
      %v512 = vadd.f32 %v464, %v493
      %v513 = vadd.f32 %v465, %v495
      %v514 = vadd.f32 %v466, %v497
      %v515 = vadd.f32 %v467, %v499
      %vm516 = vcmask 121856
      %517 = vst.msk [vmem:[#allocation3] sm:$0xff] %vm516, %v508
      %518 = vst.msk [vmem:[#allocation3 + $0x8] sm:$0xff] %vm516, %v509
      %519 = vst.msk [vmem:[#allocation3 + $0x10] sm:$0xff] %vm516, %v510
      %520 = vst.msk [vmem:[#allocation3 + $0x18] sm:$0xff] %vm516, %v511
      %521 = vst.msk [vmem:[#allocation3 + $0x20] sm:$0xff] %vm516, %v512
      %522 = vst.msk [vmem:[#allocation3 + $0x28] sm:$0xff] %vm516, %v513
      %523 = vst.msk [vmem:[#allocation3 + $0x30] sm:$0xff] %vm516, %v514
      %524 = vst.msk [vmem:[#allocation3 + $0x38] sm:$0xff] %vm516, %v515
      // Predicated region
      $region29: #{tpu_custom_call.1} parent=23 // pred_check
        %p525 = pneg %p170
      $region30: #{tpu_custom_call.1} parent=23 // pred_check_branch
        %527 = sbr.rel (%p525) target = $region32
      $region31: #{tpu_custom_call.1} parent=23 // pred_region
        %v528 = vld [vmem:[#allocation2] sm:$0xff]
        %v529 = vld [vmem:[#allocation2 + $0x8] sm:$0xff]
        %v530 = vld [vmem:[#allocation2 + $0x10] sm:$0xff]
        %v531 = vld [vmem:[#allocation2 + $0x18] sm:$0xff]
        %v532 = vld [vmem:[#allocation2 + $0x20] sm:$0xff]
        %v533 = vld [vmem:[#allocation2 + $0x28] sm:$0xff]
        %v534 = vld [vmem:[#allocation2 + $0x30] sm:$0xff]
        %v535 = vld [vmem:[#allocation2 + $0x38] sm:$0x7f]
        %v536 = vsel %vm450, %v528, 0.0
        %v537 = vsel %vm450, %v529, 0.0
        %v538 = vadd.f32 %v536, %v537
        %v539 = vsel %vm450, %v530, 0.0
        %v540 = vadd.f32 %v538, %v539
        %v541 = vsel %vm450, %v531, 0.0
        %v542 = vadd.f32 %v540, %v541
        %v543 = vsel %vm450, %v532, 0.0
        %v544 = vadd.f32 %v542, %v543
        %v545 = vsel %vm450, %v533, 0.0
        %v546 = vadd.f32 %v544, %v545
        %v547 = vsel %vm450, %v534, 0.0
        %v548 = vadd.f32 %v546, %v547
        %v549 = vsel %vm458, %v535, 0.0
        %v550 = vadd.f32 %v548, %v549
        %551 = vadd.xlane.f32.xlu0 %v550
        %v552 = vpop.xlane.xlu0 %551
        %v553 = vrot.slane %v552, 4
        %v554 = vadd.f32 %v552, %v553
        %v555 = vrot.slane %v554, 2
        %v556 = vadd.f32 %v554, %v555
        %v557 = vrot.slane %v556, 1
        %v558 = vadd.f32 %v556, %v557
        %s559 = vtos %v558
        %v560 = vstv %s559
        %vm561 = vcmask 0
        %562 = vst.msk [vmem:[%s166] sm:$0x1] %vm561, %v560
        %v563 = vld [vmem:[#allocation3] sm:$0xff]
        %v564 = vld [vmem:[#allocation3 + $0x8] sm:$0xff]
        %v565 = vld [vmem:[#allocation3 + $0x10] sm:$0xff]
        %v566 = vld [vmem:[#allocation3 + $0x18] sm:$0xff]
        %v567 = vld [vmem:[#allocation3 + $0x20] sm:$0xff]
        %v568 = vld [vmem:[#allocation3 + $0x28] sm:$0xff]
        %v569 = vld [vmem:[#allocation3 + $0x30] sm:$0xff]
        %v570 = vld [vmem:[#allocation3 + $0x38] sm:$0xff]
        %v571 = vsel %vm516, %v563, 0.0
        %v572 = vsel %vm516, %v564, 0.0
        %v573 = vadd.f32 %v571, %v572
        %v574 = vsel %vm516, %v565, 0.0
        %v575 = vadd.f32 %v573, %v574
        %v576 = vsel %vm516, %v566, 0.0
        %v577 = vadd.f32 %v575, %v576
        %v578 = vsel %vm516, %v567, 0.0
        %v579 = vadd.f32 %v577, %v578
        %v580 = vsel %vm516, %v568, 0.0
        %v581 = vadd.f32 %v579, %v580
        %v582 = vsel %vm516, %v569, 0.0
        %v583 = vadd.f32 %v581, %v582
        %v584 = vsel %vm516, %v570, 0.0
        %v585 = vadd.f32 %v583, %v584
        %586 = vadd.xlane.f32.xlu0 %v585
        %v587 = vpop.xlane.xlu0 %586
        %v588 = vrot.slane %v587, 4
        %v589 = vadd.f32 %v587, %v588
        %v590 = vrot.slane %v589, 2
        %v591 = vadd.f32 %v589, %v590
        %v592 = vrot.slane %v591, 1
        %v593 = vadd.f32 %v591, %v592
        %s594 = vtos %v593
        %v595 = vstv %s594
        %596 = vst.msk [vmem:[%s169] sm:$0x1] %vm561, %v595
      $region32: #{tpu_custom_call.1} parent=23 // pred_fallthru
        _
      %p597 = scmp.lt.s32.totalorder %s18, 1
      %s598 = scalar_select %p597, %s18, 1
      %s599 = scalar_lea.vmem %s1, %s598
      %p600 = scmp.lt.s32.totalorder %s18, 1
      %s601 = scalar_select %p600, %s18, 1
      %s602 = scalar_lea.vmem %s2, %s601
      // Predicated region
      $region33: #{tpu_custom_call.1} parent=23 // pred_check
        %p603 = pneg %p72
      $region34: #{tpu_custom_call.1} parent=23 // pred_check_branch
        %605 = sbr.rel (%p603) target = $region36
      $region35: #{tpu_custom_call.1} parent=23 // pred_region
        _
      $region36: #{tpu_custom_call.1} parent=23 // pred_fallthru
        _
      // Predicated region
      $region37: #{tpu_custom_call.1} parent=23 // pred_check
        %p606 = pneg %p98
      $region38: #{tpu_custom_call.1} parent=23 // pred_check_branch
        %608 = sbr.rel (%p606) target = $region40
      $region39: #{tpu_custom_call.1} parent=23 // pred_region
        _
      $region40: #{tpu_custom_call.1} parent=23 // pred_fallthru
        _
    $region24: #{tpu_custom_call.1} parent=5 // pred_fallthru
      _
    %p609 = scmp.le.s32.totalorder 2, %s9
    // Predicated region
    $region41: #{tpu_custom_call.1} parent=5 // pred_check
      %p610 = pneg %p609
    $region42: #{tpu_custom_call.1} parent=5 // pred_check_branch
      %612 = sbr.rel (%p610) target = $region44
    $region43: #{tpu_custom_call.1} parent=5 // pred_region
      %s613 = ssub.s32 %s9, 2
      // Predicated region
      $region45: #{tpu_custom_call.1} parent=43 // pred_check
        %p614 = pneg %p78
      $region46: #{tpu_custom_call.1} parent=43 // pred_check_branch
        %616 = sbr.rel (%p614) target = $region48
      $region47: #{tpu_custom_call.1} parent=43 // pred_region
        %p617 = scmp.lt.s32.totalorder %s20, 1
        %s618 = scalar_select %p617, %s20, 1
        %s619 = scalar_lea.vmem %s1, %s618
      $region48: #{tpu_custom_call.1} parent=43 // pred_fallthru
        _
      // Predicated region
      $region49: #{tpu_custom_call.1} parent=43 // pred_check
        %p620 = pneg %p104
      $region50: #{tpu_custom_call.1} parent=43 // pred_check_branch
        %622 = sbr.rel (%p620) target = $region52
      $region51: #{tpu_custom_call.1} parent=43 // pred_region
        %p623 = scmp.lt.s32.totalorder %s20, 1
        %s624 = scalar_select %p623, %s20, 1
        %s625 = scalar_lea.vmem %s2, %s624
      $region52: #{tpu_custom_call.1} parent=43 // pred_fallthru
        _
    $region44: #{tpu_custom_call.1} parent=5 // pred_fallthru
      _
  $region6: #{tpu_custom_call.1} parent=0 // loop_footer
    %s13 = sadd.s32 1, %s9
  $region7: #{tpu_custom_call.1} parent=0 // loop_footer_branch
    %8 = sbr.rel target = $region3
  $region8: #{tpu_custom_call.1} parent=0 // loop_exit
    _

</llo_original>
